<compile_context>
chip_gen: v6e
topology: v6e:2x2x1
jax: 0.10.0
libtpu: 0.0.40
codegen_flags: <defaults>
</compile_context>

<pallas_src>
import jax
import jax.numpy as jnp
from jax.experimental import pallas as pl
from jax.experimental.pallas import tpu as pltpu


def _round_up(x, m):
    return ((x + m - 1) // m) * m


def _cdiv(a, b):
    return -(-a // b)


def _choose_tn(out_dim, tn_max=512):
    """Largest lane-dense (multiple-of-128) N tile <= tn_max that divides out_pad."""
    out_pad = _round_up(out_dim, 128)
    for cand in (512, 384, 256, 128):
        if cand <= tn_max and out_pad % cand == 0:
            return cand
    return 128


def glu_kernel(x_ref, w_ref, b_ref, o_ref, acc_ref):
    # x_ref: (tm, tk)   w_ref: (1, tk, 2*tn)   b_ref: (1, 1, 2*tn)
    # o_ref: (tm, tn)   acc_ref: (tm, 2*tn) f32 scratch (persists across k)
    k = pl.program_id(2)

    @pl.when(k == 0)
    def _():
        acc_ref[...] = jnp.zeros_like(acc_ref)

    # One fused MXU matmul for both GLU halves, f32 accumulation.
    acc_ref[...] += jnp.dot(x_ref[...], w_ref[0],
                            preferred_element_type=jnp.float32)

    @pl.when(k == pl.num_programs(2) - 1)
    def _():
        tn = o_ref.shape[-1]
        proj = acc_ref[...] + b_ref[0]          # (tm, 2*tn), f32 epilogue
        a = proj[:, :tn]                        # lane-aligned (tn % 128 == 0)
        b = proj[:, tn:]
        o_ref[...] = (a * jax.nn.sigmoid(b)).astype(o_ref.dtype)


def pack_glu_params(weight, bias, *, tn=None, compute_dtype=jnp.bfloat16):
    """One-time (init-time) repack of PyTorch nn.Linear params for the kernel.

    weight: (2*out_dim, input_dim), bias: (2*out_dim,)  (PyTorch layout).
    Returns w_packed (nt, K_pad, 2*tn), b_packed (nt, 1, 2*tn) [f32], out_dim, tk.
    For output tile j, w_packed[j] holds [a-cols(tn) | b-cols(tn)] so the kernel
    does a single fused dot and chunks in-kernel.
    """
    two_out, K = weight.shape
    out_dim = two_out // 2
    if tn is None:
        tn = _choose_tn(out_dim)
    out_pad = _round_up(out_dim, tn)
    nt = out_pad // tn

    # K tiling / lane padding.
    if K > 1024:              # large K: tile the reduction axis
        tk = 512
        K_pad = _round_up(K, tk)
    elif K >= 128:            # moderate K: pad to lane boundary, single K tile
        K_pad = _round_up(K, 128)
        tk = K_pad
    else:                     # tiny K: padding would only inflate x bytes
        K_pad, tk = K, K

    wa = weight[:out_dim].T                                    # (K, out_dim)
    wb = weight[out_dim:].T
    ba = bias[:out_dim]
    bb = bias[out_dim:]
    if out_pad != out_dim:
        pad = out_pad - out_dim
        wa = jnp.pad(wa, ((0, 0), (0, pad)))
        wb = jnp.pad(wb, ((0, 0), (0, pad)))
        ba = jnp.pad(ba, (0, pad))
        bb = jnp.pad(bb, (0, pad))
    if K_pad != K:
        wa = jnp.pad(wa, ((0, K_pad - K), (0, 0)))
        wb = jnp.pad(wb, ((0, K_pad - K), (0, 0)))

    w_packed = jnp.concatenate(
        [wa.reshape(K_pad, nt, tn), wb.reshape(K_pad, nt, tn)], axis=-1)
    w_packed = jnp.transpose(w_packed, (1, 0, 2))              # (nt, K_pad, 2*tn)
    b_packed = jnp.concatenate(
        [ba.reshape(nt, 1, tn), bb.reshape(nt, 1, tn)], axis=-1)
    b_packed = b_packed.astype(jnp.float32)                    # f32 epilogue

    if compute_dtype is not None:
        w_packed = w_packed.astype(compute_dtype)
    return w_packed, b_packed, out_dim, tk


def glu_block_packed(x, w_packed, b_packed, out_dim, tk, *,
                     tm_max=256, compute_dtype=jnp.bfloat16, out_dtype=None):
    """Hot-path call with pre-packed params. x: (B, input_dim)."""
    B, K = x.shape
    nt, K_pad, two_tn = w_packed.shape
    assert K <= K_pad, "input_dim mismatch between x and packed weight"
    tn = two_tn // 2
    out_pad = nt * tn
    nk = K_pad // tk

    if out_dtype is None:
        out_dtype = x.dtype
    if compute_dtype is not None:
        x = x.astype(compute_dtype)

    # Pad activations along K to match the packed weight (weights padded at pack time).
    if K_pad != K:
        x = jnp.pad(x, ((0, 0), (0, K_pad - K)))

    # Batch tiling: balanced tiles, sublane-dense for the compute dtype.
    sublane = 16 if x.dtype == jnp.bfloat16 else 8
    n_bt = max(1, _cdiv(B, tm_max))
    tm = _round_up(_cdiv(B, n_bt), sublane)
    B_pad = _round_up(B, tm)
    bt = B_pad // tm

    # v7x has 2 TensorCores: make sure there are >= 2 parallel grid steps if possible.
    if bt * nt < 2 and tm > sublane:
        tm_half = _round_up(_cdiv(B, 2), sublane)
        if tm_half < tm:
            tm = tm_half
            B_pad = _round_up(B, tm)
            bt = B_pad // tm

    if B_pad != B:
        x = jnp.pad(x, ((0, B_pad - B), (0, 0)))

    # Grid ordering by streamed HBM bytes (only matters when K is un-tiled,
    # since with nk > 1 both x and W are re-streamed either way).
    isz_x = jnp.dtype(x.dtype).itemsize
    isz_w = jnp.dtype(w_packed.dtype).itemsize
    isz_o = jnp.dtype(out_dtype).itemsize
    x_total = B_pad * K_pad * isz_x
    w_total = nt * K_pad * two_tn * isz_w
    batch_inner = (nk == 1) and (nt * x_total + w_total < x_total + bt * w_total)

    if batch_inner:
        grid = (nt, bt, nk)
        x_map = lambda j, i, k: (i, k)
        w_map = lambda j, i, k: (j, k, 0)
        b_map = lambda j, i, k: (j, 0, 0)
        o_map = lambda j, i, k: (i, j)
    else:
        grid = (bt, nt, nk)
        x_map = lambda i, j, k: (i, k)
        w_map = lambda i, j, k: (j, k, 0)
        b_map = lambda i, j, k: (j, 0, 0)
        o_map = lambda i, j, k: (i, j)

    # VMEM budget: double-buffered tiles + f32 accumulator + internal-scratch headroom.
    est = (2 * (tm * tk * isz_x            # x tile
                + tk * two_tn * isz_w      # weight tile
                + two_tn * 4               # bias tile
                + tm * tn * isz_o)         # output tile
           + tm * two_tn * 4               # f32 accumulator scratch
           + (1 << 20))                    # Mosaic internal scratch headroom
    try:
        cap = int(pltpu.get_tpu_info().vmem_capacity_bytes * 3 // 4)
    except Exception:
        cap = 48 * 2**20                   # safe on v5e/v6e/v7x
    vmem_limit = int(min(cap, max(32 * 2**20, 2 * est)))

    out = pl.pallas_call(
        glu_kernel,
        out_shape=jax.ShapeDtypeStruct((B_pad, out_pad), out_dtype),
        grid_spec=pltpu.PrefetchScalarGridSpec(
            num_scalar_prefetch=0,
            grid=grid,
            in_specs=[
                pl.BlockSpec((tm, tk), x_map),
                pl.BlockSpec((1, tk, two_tn), w_map),
                pl.BlockSpec((1, 1, two_tn), b_map),
            ],
            out_specs=pl.BlockSpec((tm, tn), o_map),
            scratch_shapes=[pltpu.VMEM((tm, two_tn), jnp.float32)],
        ),
        compiler_params=pltpu.CompilerParams(
            dimension_semantics=("parallel", "parallel", "arbitrary"),
            vmem_limit_bytes=vmem_limit,
        ),
    )(x, w_packed, b_packed)

    # Strip batch / output-feature padding back to the logical shape.
    return out[:B, :out_dim]


def glu_block(x, weight, bias, *, tn=None, tm_max=256, compute_dtype=jnp.bfloat16):
    """GLU_Block forward. weight: (2*out_dim, input_dim), bias: (2*out_dim,)
    in PyTorch nn.Linear layout.  In real use, call pack_glu_params once at
    init and reuse glu_block_packed in the hot path.  Output dtype always
    matches x.dtype regardless of compute_dtype."""
    out_dtype = x.dtype
    w_packed, b_packed, out_dim, tk = pack_glu_params(
        weight, bias, tn=tn, compute_dtype=compute_dtype)
    return glu_block_packed(
        x, w_packed, b_packed, out_dim, tk,
        tm_max=tm_max, compute_dtype=compute_dtype, out_dtype=out_dtype)


if __name__ == "__main__":
    # Small shapes consistent with the module: batch=16, input_dim=32, output_dim=64.
    B, input_dim, output_dim = 16, 32, 64

    key = jax.random.PRNGKey(0)
    kx, kw, kb = jax.random.split(key, 3)
    x = jax.random.normal(kx, (B, input_dim), dtype=jnp.float32)
    # PyTorch fc.weight shape: (2*out, in), bias: (2*out,).
    weight = jax.random.normal(kw, (2 * output_dim, input_dim), dtype=jnp.float32) * 0.1
    bias = jax.random.normal(kb, (2 * output_dim,), dtype=jnp.float32) * 0.1

    # Pure-JAX reference (same semantics as the PyTorch forward).
    proj = x @ weight.T + bias
    ref = proj[:, :output_dim] * jax.nn.sigmoid(proj[:, output_dim:])

    # Default path: bf16 MXU operands, f32 accumulation, f32 output.
    out = jax.block_until_ready(glu_block(x, weight, bias))
    assert out.shape == (B, output_dim)
    assert out.dtype == x.dtype
    assert jnp.allclose(out, ref, atol=2e-2, rtol=2e-2)

    # Exact f32 path (compute_dtype=None) must match the reference tightly.
    out_f32 = jax.block_until_ready(glu_block(x, weight, bias, compute_dtype=None))
    assert out_f32.dtype == x.dtype
    assert jnp.allclose(out_f32, ref, atol=1e-5, rtol=1e-5)

    print("KERNEL_OK")
</pallas_src>

<mosaic_0001>
module attributes {stable_mosaic.version = 11 : i64} {
  func.func @glu_kernel(%arg0: i32, %arg1: i32, %arg2: i32, %arg3: memref<16x32xbf16, #tpu.memory_space<vmem>>, %arg4: memref<1x32x256xbf16, #tpu.memory_space<vmem>>, %arg5: memref<1x1x256xf32, #tpu.memory_space<vmem>>, %arg6: memref<16x128xf32, #tpu.memory_space<vmem>>, %arg7: memref<16x256xf32, #tpu.memory_space<vmem>>) attributes {dimension_semantics = [#tpu.dimension_semantics<parallel>, #tpu.dimension_semantics<parallel>, #tpu.dimension_semantics<arbitrary>], iteration_bounds = array<i64: 1, 1, 1>, scalar_prefetch = 0 : i64, scratch_operands = 1 : i64, tpu.core_type = #tpu.core_type<tc>, window_params = [{transform_indices = @transform_0, window_bounds = array<i64: 16, 32>}, {transform_indices = @transform_1, window_bounds = array<i64: 1, 32, 256>}, {transform_indices = @transform_2, window_bounds = array<i64: 1, 1, 256>}, {transform_indices = @transform_3, window_bounds = array<i64: 16, 128>}]} {
    %c0_i32 = arith.constant 0 : i32
    %0 = arith.cmpi eq, %arg2, %c0_i32 : i32
    %1 = arith.extui %0 : i1 to i32
    %c0_i32_0 = arith.constant 0 : i32
    %2 = arith.cmpi ne, %1, %c0_i32_0 : i32
    scf.if %2 {
      %cst_11 = arith.constant 0.000000e+00 : f32
      %13 = vector.broadcast %cst_11 : f32 to vector<16x256xf32>
      %c0_12 = arith.constant 0 : index
      %c0_13 = arith.constant 0 : index
      %14 = vector.load %arg7[%c0_12, %c0_13] : memref<16x256xf32, #tpu.memory_space<vmem>>, vector<16x256xf32>
      tpu.vector_store %arg7[%c0_12, %c0_13], %13 {strides = array<i32>} : memref<16x256xf32, #tpu.memory_space<vmem>>, vector<16x256xf32>,
    } else {
    }
    %c0 = arith.constant 0 : index
    %c0_1 = arith.constant 0 : index
    %3 = vector.load %arg7[%c0, %c0_1] : memref<16x256xf32, #tpu.memory_space<vmem>>, vector<16x256xf32>
    %c0_2 = arith.constant 0 : index
    %c0_3 = arith.constant 0 : index
    %4 = vector.load %arg3[%c0_2, %c0_3] : memref<16x32xbf16, #tpu.memory_space<vmem>>, vector<16x32xbf16>
    %c0_4 = arith.constant 0 : index
    %c0_5 = arith.constant 0 : index
    %c0_6 = arith.constant 0 : index
    %5 = vector.load %arg4[%c0_4, %c0_5, %c0_6] : memref<1x32x256xbf16, #tpu.memory_space<vmem>>, vector<1x32x256xbf16>
    %6 = vector.shape_cast %5 : vector<1x32x256xbf16> to vector<32x256xbf16>
    %cst = arith.constant dense<0.000000e+00> : vector<16x256xf32>
    %7 = tpu.matmul %4, %6, %cst {dimension_numbers = #tpu.dot_dimension_numbers<[1], [0], [0], [1], [0, 0, 1, 1], [], []>} : vector<16x32xbf16>, vector<32x256xbf16>, vector<16x256xf32> -> vector<16x256xf32>
    %8 = arith.addf %3, %7 : vector<16x256xf32>
    %c0_7 = arith.constant 0 : index
    %c0_8 = arith.constant 0 : index
    %9 = vector.load %arg7[%c0_7, %c0_8] : memref<16x256xf32, #tpu.memory_space<vmem>>, vector<16x256xf32>
    tpu.vector_store %arg7[%c0_7, %c0_8], %8 {strides = array<i32>} : memref<16x256xf32, #tpu.memory_space<vmem>>, vector<16x256xf32>,
    %c0_i32_9 = arith.constant 0 : i32
    %10 = arith.cmpi eq, %arg2, %c0_i32_9 : i32
    %11 = arith.extui %10 : i1 to i32
    %c0_i32_10 = arith.constant 0 : i32
    %12 = arith.cmpi ne, %11, %c0_i32_10 : i32
    scf.if %12 {
      %c0_11 = arith.constant 0 : index
      %c0_12 = arith.constant 0 : index
      %13 = vector.load %arg7[%c0_11, %c0_12] : memref<16x256xf32, #tpu.memory_space<vmem>>, vector<16x256xf32>
      %c0_13 = arith.constant 0 : index
      %c0_14 = arith.constant 0 : index
      %c0_15 = arith.constant 0 : index
      %14 = vector.load %arg5[%c0_13, %c0_14, %c0_15] : memref<1x1x256xf32, #tpu.memory_space<vmem>>, vector<1x1x256xf32>
      %15 = vector.shape_cast %14 : vector<1x1x256xf32> to vector<1x256xf32>
      %16 = vector.broadcast %15 : vector<1x256xf32> to vector<16x256xf32>
      %17 = arith.addf %13, %16 : vector<16x256xf32>
      %18 = vector.extract_strided_slice %17 {offsets = [0, 0], sizes = [16, 128], strides = [1, 1]} : vector<16x256xf32> to vector<16x128xf32>
      %19 = vector.extract_strided_slice %17 {offsets = [0, 128], sizes = [16, 128], strides = [1, 1]} : vector<16x256xf32> to vector<16x128xf32>
      %20 = arith.negf %19 : vector<16x128xf32>
      %21 = math.exp %20 : vector<16x128xf32>
      %cst_16 = arith.constant 1.000000e+00 : f32
      %22 = vector.broadcast %cst_16 : f32 to vector<16x128xf32>
      %23 = arith.addf %22, %21 : vector<16x128xf32>
      %24 = arith.divf %22, %23 : vector<16x128xf32>
      %25 = arith.mulf %18, %24 : vector<16x128xf32>
      %c0_17 = arith.constant 0 : index
      %c0_18 = arith.constant 0 : index
      %26 = vector.load %arg6[%c0_17, %c0_18] : memref<16x128xf32, #tpu.memory_space<vmem>>, vector<16x128xf32>
      tpu.vector_store %arg6[%c0_17, %c0_18], %25 {strides = array<i32>} : memref<16x128xf32, #tpu.memory_space<vmem>>, vector<16x128xf32>,
    } else {
    }
    return
  }
  func.func @transform_0(%arg0: i32, %arg1: i32, %arg2: i32) -> (i32, i32) {
    %c0_i32 = arith.constant 0 : i32
    return %arg0, %arg2 : i32, i32
  }
  func.func @transform_1(%arg0: i32, %arg1: i32, %arg2: i32) -> (i32, i32, i32) {
    %c0_i32 = arith.constant 0 : i32
    %c0_i32_0 = arith.constant 0 : i32
    return %arg1, %arg2, %c0_i32 : i32, i32, i32
  }
  func.func @transform_2(%arg0: i32, %arg1: i32, %arg2: i32) -> (i32, i32, i32) {
    %c0_i32 = arith.constant 0 : i32
    %c0_i32_0 = arith.constant 0 : i32
    %c0_i32_1 = arith.constant 0 : i32
    return %arg1, %c0_i32, %c0_i32_0 : i32, i32, i32
  }
  func.func @transform_3(%arg0: i32, %arg1: i32, %arg2: i32) -> (i32, i32) {
    %c0_i32 = arith.constant 0 : i32
    return %arg0, %arg1 : i32, i32
  }
}

</mosaic_0001>

<llo_original>
// kernel: tpu_custom_call.1
$region0: #{tpu_custom_call.1}
  #allocation0 [shape = 'u32[]', space=smem, size = 0x4, offset = 0x4, fixed_abs, tag = 'smem constant byte address 0x4 - core index']
  #allocation1 [shape = 'u32[144,128]{1,0:T(1,128)}', space=vmem, size = 0x12000, scoped, tag = 'internal scratch']
  #allocation2 [shape = 'f32[16,256]{1,0:T(8,128)}', space=vmem, size = 0x4000, scoped, tag = 'scratch operand']
  %s0 = inlined_call_operand.hbm [shape: bf16[16,32], index: 0, kind: input, shape index: {}]
  %s1 = inlined_call_operand.hbm [shape: bf16[1,32,256], index: 1, kind: input, shape index: {}]
  %s2 = inlined_call_operand.vmem [shape: f32[1,1,256], index: 2, kind: input, shape index: {}]
  %s3 = inlined_call_operand.hbm [shape: f32[16,128], index: 3, kind: output, shape index: {}]
  %s4 = sld [smem:[#allocation0]]
  $region38: #{tpu_custom_call.1} parent=0
    _
  %s6 = ssub.s32 1, %s4
  %s7 = scalar_select 0, %s6, %s4
  $region1: #{tpu_custom_call.1} parent=0
    #allocation3 [shape = 'u8[4096]{0}', space=vmem, size = 0x1000, scoped, tag = 'input window, operand 0, single buffered']
    #allocation4 [shape = 's32[1]{0}', space=sflag, size = 0x4, scoped, tag = 'scoped memory for tpu_custom_call.1']
    #allocation5 [shape = 's32[1]{0}', space=sflag, size = 0x4, scoped, tag = 'scoped memory for tpu_custom_call.1']
    #allocation6 [shape = 'u8[16384]{0}', space=vmem, size = 0x4000, scoped, tag = 'input window, operand 1, single buffered']
    #allocation7 [shape = 's32[1]{0}', space=sflag, size = 0x4, scoped, tag = 'scoped memory for tpu_custom_call.1']
    #allocation8 [shape = 'u8[8192]{0}', space=vmem, size = 0x2000, scoped, tag = 'output window, operand 0, single buffered']
    %8 = vsyncpa [#allocation4], 0
    %9 = vsyncpa [#allocation7], 0
    %10 = vsyncpa [#allocation5], 0
    // Predicated region
    $region2: #{tpu_custom_call.1} parent=1 // pred_check
      _
    $region3: #{tpu_custom_call.1} parent=1 // pred_check_branch
      %12 = sbr.rel (0) target = $region5
    $region4: #{tpu_custom_call.1} parent=1 // pred_region
      %s14 = ssub.s32 128, 128
      %15 = vsyncadd [#allocation4], %s14
      %s16 = sshll.u32 [#allocation3], 4
      %s17 = int_to_ptr.vmem [resolvable:$true] %s16
      %22 = dma.hbm_to_vmem [thread:$0]  %s0, 128, %s17, [#allocation4], 64, 64, 4
    $region5: #{tpu_custom_call.1} parent=1 // pred_fallthru
      _
    // Predicated region
    $region6: #{tpu_custom_call.1} parent=1 // pred_check
      _
    $region7: #{tpu_custom_call.1} parent=1 // pred_check_branch
      %24 = sbr.rel (0) target = $region9
    $region8: #{tpu_custom_call.1} parent=1 // pred_region
      %s26 = ssub.s32 512, 512
      %27 = vsyncadd [#allocation7], %s26
      %s28 = sshll.u32 [#allocation6], 4
      %s29 = int_to_ptr.vmem [resolvable:$true] %s28
      %34 = dma.hbm_to_vmem [thread:$0]  %s1, 512, %s29, [#allocation7], 128, 128, 8
    $region9: #{tpu_custom_call.1} parent=1 // pred_fallthru
      _
    // Predicated region
    $region10: #{tpu_custom_call.1} parent=1 // pred_check
      _
    $region11: #{tpu_custom_call.1} parent=1 // pred_check_branch
      %36 = sbr.rel (0) target = $region13
    $region12: #{tpu_custom_call.1} parent=1 // pred_region
      _
    $region13: #{tpu_custom_call.1} parent=1 // pred_fallthru
      _
    // Predicated region
    $region14: #{tpu_custom_call.1} parent=1 // pred_check
      _
    $region15: #{tpu_custom_call.1} parent=1 // pred_check_branch
      %38 = sbr.rel (0) target = $region17
    $region16: #{tpu_custom_call.1} parent=1 // pred_region
      %39 = dma.done [#allocation4], 128
    $region17: #{tpu_custom_call.1} parent=1 // pred_fallthru
      _
    // Predicated region
    $region18: #{tpu_custom_call.1} parent=1 // pred_check
      _
    $region19: #{tpu_custom_call.1} parent=1 // pred_check_branch
      %41 = sbr.rel (0) target = $region21
    $region20: #{tpu_custom_call.1} parent=1 // pred_region
      %42 = dma.done [#allocation7], 512
    $region21: #{tpu_custom_call.1} parent=1 // pred_fallthru
      _
    %p44 = scmp.eq.s32.totalorder 0, 0
    // Predicated region
    $region22: #{tpu_custom_call.1} parent=1 // pred_check
      %p45 = pneg %p44
    $region23: #{tpu_custom_call.1} parent=1 // pred_check_branch
      %47 = sbr.rel (%p45) target = $region25
    $region24: #{tpu_custom_call.1} parent=1 // pred_region
      %48 = vst [vmem:[#allocation2] sm:$0xff] 0.0
      %49 = vst [vmem:[#allocation2 + $0x8] sm:$0xff] 0.0
      %50 = vst [vmem:[#allocation2 + $0x10] sm:$0xff] 0.0
      %51 = vst [vmem:[#allocation2 + $0x18] sm:$0xff] 0.0
    $region25: #{tpu_custom_call.1} parent=1 // pred_fallthru
      _
    %v52 = vld [vmem:[#allocation2] sm:$0xff]
    %v53 = vld [vmem:[#allocation2 + $0x8] sm:$0xff]
    %v54 = vld [vmem:[#allocation2 + $0x10] sm:$0xff]
    %v55 = vld [vmem:[#allocation2 + $0x18] sm:$0xff]
    %v56 = vld [vmem:[#allocation3] sm:$0xf]
    %v57 = vld [vmem:[#allocation3 + $0x4] sm:$0xf]
    %v58 = vld [vmem:[#allocation6] sm:$0xff]
    %v59 = vld [vmem:[#allocation6 + $0x8] sm:$0xff]
    %v60 = vld [vmem:[#allocation6 + $0x10] sm:$0xff]
    %v61 = vld [vmem:[#allocation6 + $0x18] sm:$0xff]
    %v64 = vunpack.c.l.b16 %v56
    %v65 = vunpack.c.l.b16 %v57
    %v66 = vpack.c.b16 %v65, %v64
    %v71 = vunpack.c.l.b16 %v58
    %v72 = vunpack.c.h.b16 %v58
    %v73 = vunpack.c.l.b16 %v59
    %v74 = vunpack.c.h.b16 %v59
    %v75 = vunpack.c.l.b16 %v60
    %v76 = vunpack.c.h.b16 %v60
    %v77 = vunpack.c.l.b16 %v61
    %v78 = vunpack.c.h.b16 %v61
    %v79 = vpack.c.b16 %v73, %v71
    %v80 = vpack.c.b16 %v74, %v72
    %v81 = vpack.c.b16 %v77, %v75
    %v82 = vpack.c.b16 %v78, %v76
    %vm87 = vcmask 261120
    %v89 = vsel %vm87, %v66, 0
    %91 = vmatprep.subr.bf16.mxu0 0
    %92 = vmatpush1.bf16.msra.mxu0 0
    %93 = vmatprep.subr.bf16.mxu0 0
    %94 = vmatpush1.bf16.msra.mxu0 0
    %95 = vmatprep.subr.bf16.mxu0 0
    %96 = vmatpush1.bf16.msra.mxu0 0
    %97 = vmatprep.subr.bf16.mxu0 0
    %98 = vmatpush1.bf16.msra.mxu0 0
    %99 = vmatprep.subr.bf16.mxu0 0
    %100 = vmatpush1.bf16.msra.mxu0 0
    %101 = vmatprep.subr.bf16.mxu0 0
    %102 = vmatpush1.bf16.msra.mxu0 0
    %103 = vmatprep.subr.bf16.mxu0 %v82
    %104 = vmatpush1.bf16.msra.mxu0 %v81
    %105 = vmatprep.subr.bf16.mxu0 %v80
    %106 = vmatpush1.bf16.msra.mxu0 %v79
    %107 = vmatprep.subr.bf16.mxu0 0
    %108 = vmatpush2.bf16.msra.mxu0 0
    %109 = vmatprep.subr.bf16.mxu0 0
    %110 = vmatpush2.bf16.msra.mxu0 0
    %111 = vmatprep.subr.bf16.mxu0 0
    %112 = vmatpush2.bf16.msra.mxu0 0
    %113 = vmatprep.subr.bf16.mxu0 0
    %114 = vmatpush2.bf16.msra.mxu0 0
    %115 = vmatprep.subr.bf16.mxu0 0
    %116 = vmatpush2.bf16.msra.mxu0 0
    %117 = vmatprep.subr.bf16.mxu0 0
    %118 = vmatpush2.bf16.msra.mxu0 0
    %119 = vmatprep.subr.bf16.mxu0 0
    %120 = vmatpush2.bf16.msra.mxu0 0
    %121 = vmatprep.subr.bf16.mxu0 0
    %122 = vmatpush2.bf16.msra.mxu0 0
    %123 = vmatprep.mubr.bf16.mxu0 0
    %124 = vmatmul.mubr.bf16.gmra.mxu0 %v89
    %v125 = vpop.f32.mrf.mxu0
    %v126 = vadd.f32 0.0, %v125
    %v127 = vpop.f32.mrf.mxu0
    %v128 = vadd.f32 0.0, %v127
    %v129 = vpop.f32.mrf.mxu0
    %v130 = vadd.f32 0.0, %v129
    %v131 = vpop.f32.mrf.mxu0
    %v132 = vadd.f32 0.0, %v131
    %133 = vdwg.mxu0
    %v134 = vadd.f32 %v52, %v126
    %v135 = vadd.f32 %v53, %v128
    %v136 = vadd.f32 %v54, %v130
    %v137 = vadd.f32 %v55, %v132
    %138 = vst [vmem:[#allocation2] sm:$0xff] %v134
    %139 = vst [vmem:[#allocation2 + $0x8] sm:$0xff] %v135
    %140 = vst [vmem:[#allocation2 + $0x10] sm:$0xff] %v136
    %141 = vst [vmem:[#allocation2 + $0x18] sm:$0xff] %v137
    // Predicated region
    $region26: #{tpu_custom_call.1} parent=1 // pred_check
      %p142 = pneg %p44
    $region27: #{tpu_custom_call.1} parent=1 // pred_check_branch
      %144 = sbr.rel (%p142) target = $region29
    $region28: #{tpu_custom_call.1} parent=1 // pred_region
      %v145 = vld [vmem:[#allocation2] sm:$0xff]
      %v146 = vld [vmem:[#allocation2 + $0x8] sm:$0xff]
      %v147 = vld [vmem:[#allocation2 + $0x10] sm:$0xff]
      %v148 = vld [vmem:[#allocation2 + $0x18] sm:$0xff]
      %v149 = vld [vmem:[%s2] sm:$0x3]
      %v151 = vlaneseq
      %v152 = vshrl.u32 %v151, 7
      %v153 = vsub.s32 0, %v152
      %v154 = vrot.slane %v149, %v153
      %v155 = vlaneseq
      %v156 = vshrl.u32 %v155, 7
      %v157 = vsub.s32 1, %v156
      %v158 = vrot.slane %v149, %v157
      %v161 = vadd.f32 %v145, %v154
      %v162 = vadd.f32 %v146, %v158
      %v163 = vadd.f32 %v147, %v154
      %v164 = vadd.f32 %v148, %v158
      %v165 = vxor.u32 %v162, 2147483648
      %v166 = vxor.u32 %v164, 2147483648
      %v167 = vmul.f32 %v165, 1.442695
      %v168 = vpow.pop %v167
      %v169 = vmul.f32 %v166, 1.442695
      %v170 = vpow.pop %v169
      %v171 = vadd.f32 %v168, 1.0
      %v172 = vadd.f32 %v170, 1.0
      %v173 = vrcp.pop %v171
      %v174 = vmul.f32 1.0, %v173
      %v175 = vrcp.pop %v172
      %v176 = vmul.f32 1.0, %v175
      %v177 = vmul.f32 %v161, %v174
      %v178 = vmul.f32 %v163, %v176
      %179 = vst [vmem:[#allocation8] sm:$0xff] %v177
      %180 = vst [vmem:[#allocation8 + $0x8] sm:$0xff] %v178
    $region29: #{tpu_custom_call.1} parent=1 // pred_fallthru
      _
    // Predicated region
    $region30: #{tpu_custom_call.1} parent=1 // pred_check
      _
    $region31: #{tpu_custom_call.1} parent=1 // pred_check_branch
      %182 = sbr.rel (0) target = $region33
    $region32: #{tpu_custom_call.1} parent=1 // pred_region
      %s184 = ssub.s32 256, 256
      %185 = vsyncadd [#allocation5], %s184
      %s186 = sshll.u32 [#allocation8], 4
      %s187 = int_to_ptr.vmem [resolvable:$true] %s186
      %192 = dma.vmem_to_hbm [thread:$0]  %s187, 256, %s3, [#allocation5], 128, 128, 8
    $region33: #{tpu_custom_call.1} parent=1 // pred_fallthru
      _
    // Predicated region
    $region34: #{tpu_custom_call.1} parent=1 // pred_check
      _
    $region35: #{tpu_custom_call.1} parent=1 // pred_check_branch
      %194 = sbr.rel (0) target = $region37
    $region36: #{tpu_custom_call.1} parent=1 // pred_region
      %195 = dma.done [#allocation5], 256
    $region37: #{tpu_custom_call.1} parent=1 // pred_fallthru
      _
    %196 = vsyncpa [#allocation4], 1
    %197 = vsyncpa [#allocation7], 1
    %198 = vsyncpa [#allocation5], 1

</llo_original>
